<compile_context>
chip_gen: v5e
topology: v5e:2x2
jax: 0.10.0
libtpu: 0.0.40
codegen_flags: <defaults>
</compile_context>

<pallas_src>
import math

import jax
import jax.numpy as jnp
from jax.experimental import pallas as pl
from jax.experimental.pallas import tpu as pltpu


# ------------------------------------------------------------------
# Target-generation detection (affects only compute dtype / MXU-tile
# packing choices; semantics identical on every generation).
# ------------------------------------------------------------------
def _tpu_generation():
    try:
        kind = jax.devices()[0].device_kind.lower()
    except Exception:
        return 6
    for g in (7, 6, 5, 4, 3, 2):
        if f"v{g}" in kind:
            return g
    return 6


def _round_up(x, m):
    return ((x + m - 1) // m) * m


# ------------------------------------------------------------------
# Deterministic parameter init (orthogonal, gain=sqrt(2), bias=0) —
# mirrors init_(nn.Linear(...)) applied to every linear in MLPBase
# (the source module applies gain=sqrt(2) to the final 1-wide critic
# linears too, so we match that).
# ------------------------------------------------------------------
def orthogonal_init(key, out_dim, in_dim, gain):
    rows, cols = out_dim, in_dim
    a = jax.random.normal(key, (rows, cols), dtype=jnp.float32)
    if rows < cols:
        a = a.T
    q, r = jnp.linalg.qr(a)
    d = jnp.diagonal(r)
    q = q * jnp.where(d >= 0, 1.0, -1.0)   # avoid sign(0)==0 zeroing a column
    if rows < cols:
        q = q.T
    return gain * q                         # (out_dim, in_dim), like torch weight


def make_linear_params(key, in_dim, out_dim, gain=math.sqrt(2.0)):
    w = orthogonal_init(key, out_dim, in_dim, gain)
    return w.T, jnp.zeros((1, out_dim), jnp.float32)   # (in, out), (1, out)


# ------------------------------------------------------------------
# Fused Pallas kernel: actor + main critic + aux critics in one step.
# ------------------------------------------------------------------
def _mlp_base_kernel(x_ref, w1_ref, b1_ref, w2_ref, b2_ref, wo_ref, bo_ref, o_ref):
    # Shapes (per grid step):
    #   x_ref : (TB, D)             compute dtype (bf16 v6e/v7x, f32 v5e)
    #   w1_ref: (D, GH)   b1_ref: (1, GH)      GH = G*H, group 0 = actor
    #   w2_ref: (NSB, SB, SB)  block-diagonal super-blocks;  b2_ref: (1, GH)
    #   wo_ref: (GH, OW)  bo_ref: (1, OW)      OW = 128-lane-padded output width
    #   o_ref : (TB, OW)  float32
    nsb, sb, _ = w2_ref.shape
    x = x_ref[...]
    cdt = x.dtype

    # Layer 1: all G groups in one MXU matmul (heads lane-concatenated).
    h1 = jnp.dot(x, w1_ref[...], preferred_element_type=jnp.float32) + b1_ref[...]
    h1 = jnp.tanh(h1.astype(cdt))

    # Layer 2: block-diagonal matmul.  nsb == 1 on v6e/v7x (single wide dot,
    # no h1 slicing); nsb == 2 on v5e (two 128-wide dots on 128-aligned slices).
    if nsb == 1:
        h2 = jnp.dot(h1, w2_ref[0], preferred_element_type=jnp.float32)
    else:
        parts = [
            jnp.dot(h1[:, s * sb:(s + 1) * sb], w2_ref[s],
                    preferred_element_type=jnp.float32)
            for s in range(nsb)
        ]
        h2 = jnp.concatenate(parts, axis=-1)
    h2 = jnp.tanh((h2 + b2_ref[...]).astype(cdt))

    # Output projection: one matmul builds the whole lane-dense slab
    # (actor identity cols 0:H, value-head columns H:H+n_heads, zero pad to OW)
    # -> single full-width unmasked store.
    out = jnp.dot(h2, wo_ref[...], preferred_element_type=jnp.float32) + bo_ref[...]
    o_ref[...] = out.astype(o_ref.dtype)


# ------------------------------------------------------------------
# Parameter container: MLPBase shapes, stored pre-packed for the kernel.
# ------------------------------------------------------------------
class MLPBaseParams:
    def __init__(self, key, num_inputs, comm_size, hidden_size=64,
                 compute_dtype=None, mxu_dim=None):
        gen = _tpu_generation()
        if compute_dtype is None:
            # bf16 matmul/tanh on v6e/v7x (bf16 VPU/EUP); f32 on v5e and older.
            compute_dtype = jnp.bfloat16 if gen >= 6 else jnp.float32
        if mxu_dim is None:
            mxu_dim = 256 if gen >= 6 else 128

        self.num_inputs = num_inputs
        self.comm_size = comm_size
        self.hidden_size = hidden_size
        self.compute_dtype = jnp.dtype(compute_dtype)

        H = hidden_size
        n_heads = 1 + comm_size            # main critic + aux critics
        G = 1 + n_heads                    # + actor
        self.n_heads = n_heads
        self.num_groups = G

        keys = jax.random.split(key, 2 + 3 * n_heads)
        w1_list, b1_list, w2_list, b2_list, w3_list, b3_list = [], [], [], [], [], []

        # group 0 = actor (2 layers)
        a_w1, a_b1 = make_linear_params(keys[0], num_inputs, H)
        a_w2, a_b2 = make_linear_params(keys[1], H, H)
        w1_list.append(a_w1); b1_list.append(a_b1)
        w2_list.append(a_w2); b2_list.append(a_b2)
        # groups 1.. = critic heads (2 layers + 1-wide output linear)
        k = 2
        for _ in range(n_heads):
            w1, b1 = make_linear_params(keys[k], num_inputs, H); k += 1
            w2, b2 = make_linear_params(keys[k], H, H); k += 1
            w3, b3 = make_linear_params(keys[k], H, 1); k += 1
            w1_list.append(w1); b1_list.append(b1)
            w2_list.append(w2); b2_list.append(b2)
            w3_list.append(w3); b3_list.append(b3)       # (H, 1), (1, 1)

        # raw per-group f32 copies kept for the pure-JAX reference
        self.raw_w1, self.raw_b1 = w1_list, b1_list
        self.raw_w2, self.raw_b2 = w2_list, b2_list
        self.raw_w3, self.raw_b3 = w3_list, b3_list

        gh = G * H

        # ---- layer 1: lane-concatenate all groups -> one fused matmul
        self.w1 = jnp.concatenate(w1_list, axis=1).astype(self.compute_dtype)  # (D, GH)
        self.b1 = jnp.concatenate(b1_list, axis=1)                             # (1, GH) f32

        # ---- layer 2: block-diagonal super-blocks sized to the MXU tile
        if mxu_dim < gh and gh % mxu_dim == 0 and mxu_dim % H == 0:
            sb = mxu_dim
        else:
            sb = gh
        nsb = gh // sb
        gps = sb // H                                     # groups per super-block
        blocks = []
        for s in range(nsb):
            blk = jnp.zeros((sb, sb), jnp.float32)
            for j in range(gps):
                g = s * gps + j
                blk = blk.at[j * H:(j + 1) * H, j * H:(j + 1) * H].set(w2_list[g])
            blocks.append(blk)
        self.w2_bd = jnp.stack(blocks).astype(self.compute_dtype)              # (nsb, sb, sb)
        self.b2 = jnp.concatenate(b2_list, axis=1)                             # (1, GH) f32

        # ---- output projection: actor identity block + 1-wide heads, 128-lane padded
        out_w = max(128, _round_up(H + n_heads, 128))
        w_out = jnp.zeros((gh, out_w), jnp.float32)
        w_out = w_out.at[:H, :H].set(jnp.eye(H, dtype=jnp.float32))
        b_out = jnp.zeros((1, out_w), jnp.float32)
        for j in range(n_heads):
            g = 1 + j
            w_out = w_out.at[g * H:(g + 1) * H, H + j].set(w3_list[j][:, 0])
            b_out = b_out.at[0, H + j].set(b3_list[j][0, 0])
        self.w_out = w_out.astype(self.compute_dtype)                          # (GH, OW)
        self.b_out = b_out                                                     # (1, OW) f32
        self.out_w = out_w


# ------------------------------------------------------------------
# Wrapper
# ------------------------------------------------------------------
def _choose_batch_tile(B, max_batch_tile):
    if B <= 256:
        return B                      # tiny batch: one grid step
    # >= 2 grid steps so v7x's 2nd TensorCore gets work on the "parallel" axis;
    # rows rounded to 256 for clean (8,128)-tiled DMAs.  On v5e/v6e this is
    # just a short loop (free).
    return min(max_batch_tile, _round_up(pl.cdiv(B, 2), 256))


def mlp_base_fused_forward(params, x, *, max_batch_tile=4096):
    """Returns one (B, out_w) lane-dense slab: actor feats in [:, :H],
    head values (main critic + aux critics) in [:, H:H+n_heads]."""
    B, D = x.shape
    GH = params.w1.shape[1]
    OW = params.out_w
    nsb, sb, _ = params.w2_bd.shape

    x_c = x.astype(params.compute_dtype)

    tb = _choose_batch_tile(B, max_batch_tile)
    Bp = pl.cdiv(B, tb) * tb
    if Bp != B:
        x_c = jnp.pad(x_c, ((0, Bp - B), (0, 0)))

    grid_spec = pltpu.PrefetchScalarGridSpec(
        num_scalar_prefetch=0,
        grid=(Bp // tb,),
        in_specs=[
            # only x streams per batch tile ...
            pl.BlockSpec((tb, D), lambda i: (i, 0)),
            # ... weights/biases are whole-array, constant-index blocks (resident).
            pl.BlockSpec((D, GH), lambda i: (0, 0)),
            pl.BlockSpec((1, GH), lambda i: (0, 0)),
            pl.BlockSpec((nsb, sb, sb), lambda i: (0, 0, 0)),
            pl.BlockSpec((1, GH), lambda i: (0, 0)),
            pl.BlockSpec((GH, OW), lambda i: (0, 0)),
            pl.BlockSpec((1, OW), lambda i: (0, 0)),
        ],
        out_specs=pl.BlockSpec((tb, OW), lambda i: (i, 0)),
    )

    # Rough VMEM budget (double-buffered streams + weights); only override the
    # compiler's scoped-VMEM default when we would actually exceed it (v5e: 16 MiB).
    cbytes = params.compute_dtype.itemsize
    weight_bytes = 2 * sum(int(a.size) * a.dtype.itemsize for a in
                           (params.w1, params.b1, params.w2_bd, params.b2,
                            params.w_out, params.b_out))
    stream_bytes = 2 * (tb * D * cbytes + tb * OW * 4)
    vmem_est = weight_bytes + stream_bytes
    vmem_limit = int(min(2 * vmem_est, 64 << 20)) if vmem_est > (12 << 20) else None

    out = pl.pallas_call(
        _mlp_base_kernel,
        out_shape=jax.ShapeDtypeStruct((Bp, OW), jnp.float32),
        grid_spec=grid_spec,
        compiler_params=pltpu.CompilerParams(
            dimension_semantics=("parallel",),   # batch tiles independent
            vmem_limit_bytes=vmem_limit,
        ),
    )(x_c, params.w1, params.b1, params.w2_bd, params.b2, params.w_out, params.b_out)

    return out if Bp == B else out[:B]


def mlp_base_forward(params: MLPBaseParams, inputs, rnn_hxs, masks):
    # recurrent=False path only: masks unused, rnn_hxs passed through (size 1).
    # TODO(synk): recurrent=True (GRU) path raises NotImplementedError in the
    # source module and is not implemented here either.
    del masks
    out = mlp_base_fused_forward(params, inputs)
    H = params.hidden_size
    actor_feat = out[:, :H]
    heads = out[:, H:H + params.n_heads]        # (B, 1 + comm_size), lane-dense
    critic_val = heads[:, 0:1]
    aux_critic_vals = [heads[:, 1 + i:2 + i] for i in range(params.comm_size)]
    return critic_val, aux_critic_vals, actor_feat, rnn_hxs


# ------------------------------------------------------------------
# Pure-JAX reference (same compute-dtype casts as the kernel)
# ------------------------------------------------------------------
def _ref_forward(params, x):
    cdt = params.compute_dtype
    xc = x.astype(cdt)

    def layer(v, w, b):
        y = jnp.dot(v, w.astype(cdt), preferred_element_type=jnp.float32) + b
        return jnp.tanh(y.astype(cdt))

    a = layer(xc, params.raw_w1[0], params.raw_b1[0])
    a = layer(a, params.raw_w2[0], params.raw_b2[0])

    heads = []
    for j in range(params.n_heads):
        g = 1 + j
        h = layer(xc, params.raw_w1[g], params.raw_b1[g])
        h = layer(h, params.raw_w2[g], params.raw_b2[g])
        v = (jnp.dot(h, params.raw_w3[j].astype(cdt),
                     preferred_element_type=jnp.float32) + params.raw_b3[j])
        heads.append(v)
    return heads[0], heads[1:], a.astype(jnp.float32)


if __name__ == "__main__":
    B, NUM_INPUTS, HIDDEN, COMM_SIZE = 8, 32, 64, 2

    key = jax.random.PRNGKey(0)
    k_param, k_x, k_x2 = jax.random.split(key, 3)

    params = MLPBaseParams(k_param, NUM_INPUTS, COMM_SIZE, hidden_size=HIDDEN)
    atol = 1e-5 if params.compute_dtype == jnp.dtype(jnp.float32) else 1.5e-1

    x = jax.random.normal(k_x, (B, NUM_INPUTS), dtype=jnp.float32)
    rnn_hxs = jnp.zeros((B, 1), jnp.float32)   # recurrent_hidden_state_size == 1
    masks = jnp.ones((B, 1), jnp.float32)

    critic_val, aux_vals, actor_feat, hxs_out = mlp_base_forward(params, x, rnn_hxs, masks)
    jax.block_until_ready((critic_val, aux_vals, actor_feat, hxs_out))

    # correctness vs pure-JAX reference (small batch, single grid step)
    ref_c, ref_aux, ref_a = _ref_forward(params, x)
    assert critic_val.shape == (B, 1)
    assert actor_feat.shape == (B, HIDDEN)
    assert len(aux_vals) == COMM_SIZE and all(v.shape == (B, 1) for v in aux_vals)
    assert jnp.allclose(critic_val, ref_c, atol=atol)
    assert all(jnp.allclose(a, r, atol=atol) for a, r in zip(aux_vals, ref_aux))
    assert jnp.allclose(actor_feat, ref_a, atol=atol)
    assert jnp.array_equal(hxs_out, rnn_hxs)

    # larger non-multiple batch: exercises padding + the >=2-step "parallel"
    # grid path (both v7x TensorCores active; plain 2-step loop on v5e/v6e).
    B2 = 600
    x2 = jax.random.normal(k_x2, (B2, NUM_INPUTS), dtype=jnp.float32)
    c2, aux2, a2, _ = mlp_base_forward(
        params, x2, jnp.zeros((B2, 1), jnp.float32), jnp.ones((B2, 1), jnp.float32))
    jax.block_until_ready((c2, aux2, a2))
    r_c2, r_aux2, r_a2 = _ref_forward(params, x2)
    assert c2.shape == (B2, 1) and a2.shape == (B2, HIDDEN)
    assert jnp.allclose(c2, r_c2, atol=atol)
    assert all(jnp.allclose(a, r, atol=atol) for a, r in zip(aux2, r_aux2))
    assert jnp.allclose(a2, r_a2, atol=atol)

    print("KERNEL_OK")
</pallas_src>

<mosaic_0001>
module attributes {stable_mosaic.version = 11 : i64} {
  func.func @_mlp_base_kernel(%arg0: i32, %arg1: memref<8x32xbf16, #tpu.memory_space<vmem>>, %arg2: memref<32x256xbf16, #tpu.memory_space<vmem>>, %arg3: memref<1x256xf32, #tpu.memory_space<vmem>>, %arg4: memref<1x256x256xbf16, #tpu.memory_space<vmem>>, %arg5: memref<1x256xf32, #tpu.memory_space<vmem>>, %arg6: memref<256x128xbf16, #tpu.memory_space<vmem>>, %arg7: memref<1x128xf32, #tpu.memory_space<vmem>>, %arg8: memref<8x128xf32, #tpu.memory_space<vmem>>) attributes {dimension_semantics = [#tpu.dimension_semantics<parallel>], iteration_bounds = array<i64: 1>, scalar_prefetch = 0 : i64, scratch_operands = 0 : i64, tpu.core_type = #tpu.core_type<tc>, window_params = [{transform_indices = @transform_0, window_bounds = array<i64: 8, 32>}, {pipeline_mode = #tpu.pipeline_mode<synchronous>, transform_indices = @transform_1, window_bounds = array<i64: 32, 256>}, {pipeline_mode = #tpu.pipeline_mode<synchronous>, transform_indices = @transform_2, window_bounds = array<i64: 1, 256>}, {pipeline_mode = #tpu.pipeline_mode<synchronous>, transform_indices = @transform_3, window_bounds = array<i64: 1, 256, 256>}, {pipeline_mode = #tpu.pipeline_mode<synchronous>, transform_indices = @transform_4, window_bounds = array<i64: 1, 256>}, {pipeline_mode = #tpu.pipeline_mode<synchronous>, transform_indices = @transform_5, window_bounds = array<i64: 256, 128>}, {pipeline_mode = #tpu.pipeline_mode<synchronous>, transform_indices = @transform_6, window_bounds = array<i64: 1, 128>}, {transform_indices = @transform_7, window_bounds = array<i64: 8, 128>}]} {
    %c0 = arith.constant 0 : index
    %c0_0 = arith.constant 0 : index
    %0 = vector.load %arg1[%c0, %c0_0] : memref<8x32xbf16, #tpu.memory_space<vmem>>, vector<8x32xbf16>
    %c0_1 = arith.constant 0 : index
    %c0_2 = arith.constant 0 : index
    %1 = vector.load %arg2[%c0_1, %c0_2] : memref<32x256xbf16, #tpu.memory_space<vmem>>, vector<32x256xbf16>
    %cst = arith.constant dense<0.000000e+00> : vector<8x256xf32>
    %2 = tpu.matmul %0, %1, %cst {dimension_numbers = #tpu.dot_dimension_numbers<[1], [0], [0], [1], [0, 0, 1, 1], [], []>} : vector<8x32xbf16>, vector<32x256xbf16>, vector<8x256xf32> -> vector<8x256xf32>
    %c0_3 = arith.constant 0 : index
    %c0_4 = arith.constant 0 : index
    %3 = vector.load %arg3[%c0_3, %c0_4] : memref<1x256xf32, #tpu.memory_space<vmem>>, vector<1x256xf32>
    %4 = vector.broadcast %3 : vector<1x256xf32> to vector<8x256xf32>
    %5 = arith.addf %2, %4 : vector<8x256xf32>
    %6 = arith.truncf %5 : vector<8x256xf32> to vector<8x256xbf16>
    %7 = math.tanh %6 : vector<8x256xbf16>
    %c0_5 = arith.constant 0 : index
    %c0_6 = arith.constant 0 : index
    %c0_7 = arith.constant 0 : index
    %8 = vector.load %arg4[%c0_5, %c0_6, %c0_7] : memref<1x256x256xbf16, #tpu.memory_space<vmem>>, vector<1x256x256xbf16>
    %9 = vector.shape_cast %8 : vector<1x256x256xbf16> to vector<256x256xbf16>
    %cst_8 = arith.constant dense<0.000000e+00> : vector<8x256xf32>
    %10 = tpu.matmul %7, %9, %cst_8 {dimension_numbers = #tpu.dot_dimension_numbers<[1], [0], [0], [1], [0, 0, 1, 1], [], []>} : vector<8x256xbf16>, vector<256x256xbf16>, vector<8x256xf32> -> vector<8x256xf32>
    %c0_9 = arith.constant 0 : index
    %c0_10 = arith.constant 0 : index
    %11 = vector.load %arg5[%c0_9, %c0_10] : memref<1x256xf32, #tpu.memory_space<vmem>>, vector<1x256xf32>
    %12 = vector.broadcast %11 : vector<1x256xf32> to vector<8x256xf32>
    %13 = arith.addf %10, %12 : vector<8x256xf32>
    %14 = arith.truncf %13 : vector<8x256xf32> to vector<8x256xbf16>
    %15 = math.tanh %14 : vector<8x256xbf16>
    %c0_11 = arith.constant 0 : index
    %c0_12 = arith.constant 0 : index
    %16 = vector.load %arg6[%c0_11, %c0_12] : memref<256x128xbf16, #tpu.memory_space<vmem>>, vector<256x128xbf16>
    %cst_13 = arith.constant dense<0.000000e+00> : vector<8x128xf32>
    %17 = tpu.matmul %15, %16, %cst_13 {dimension_numbers = #tpu.dot_dimension_numbers<[1], [0], [0], [1], [0, 0, 1, 1], [], []>} : vector<8x256xbf16>, vector<256x128xbf16>, vector<8x128xf32> -> vector<8x128xf32>
    %c0_14 = arith.constant 0 : index
    %c0_15 = arith.constant 0 : index
    %18 = vector.load %arg7[%c0_14, %c0_15] : memref<1x128xf32, #tpu.memory_space<vmem>>, vector<1x128xf32>
    %19 = vector.broadcast %18 : vector<1x128xf32> to vector<8x128xf32>
    %20 = arith.addf %17, %19 : vector<8x128xf32>
    %c0_16 = arith.constant 0 : index
    %c0_17 = arith.constant 0 : index
    %21 = vector.load %arg8[%c0_16, %c0_17] : memref<8x128xf32, #tpu.memory_space<vmem>>, vector<8x128xf32>
    tpu.vector_store %arg8[%c0_16, %c0_17], %20 {strides = array<i32>} : memref<8x128xf32, #tpu.memory_space<vmem>>, vector<8x128xf32>,
    return
  }
  func.func @transform_0(%arg0: i32) -> (i32, i32) {
    %c0_i32 = arith.constant 0 : i32
    %c0_i32_0 = arith.constant 0 : i32
    return %arg0, %c0_i32 : i32, i32
  }
  func.func @transform_1(%arg0: i32) -> (i32, i32) {
    %c0_i32 = arith.constant 0 : i32
    %c0_i32_0 = arith.constant 0 : i32
    %c0_i32_1 = arith.constant 0 : i32
    return %c0_i32, %c0_i32_0 : i32, i32
  }
  func.func @transform_2(%arg0: i32) -> (i32, i32) {
    %c0_i32 = arith.constant 0 : i32
    %c0_i32_0 = arith.constant 0 : i32
    %c0_i32_1 = arith.constant 0 : i32
    return %c0_i32, %c0_i32_0 : i32, i32
  }
  func.func @transform_3(%arg0: i32) -> (i32, i32, i32) {
    %c0_i32 = arith.constant 0 : i32
    %c0_i32_0 = arith.constant 0 : i32
    %c0_i32_1 = arith.constant 0 : i32
    %c0_i32_2 = arith.constant 0 : i32
    return %c0_i32, %c0_i32_0, %c0_i32_1 : i32, i32, i32
  }
  func.func @transform_4(%arg0: i32) -> (i32, i32) {
    %c0_i32 = arith.constant 0 : i32
    %c0_i32_0 = arith.constant 0 : i32
    %c0_i32_1 = arith.constant 0 : i32
    return %c0_i32, %c0_i32_0 : i32, i32
  }
  func.func @transform_5(%arg0: i32) -> (i32, i32) {
    %c0_i32 = arith.constant 0 : i32
    %c0_i32_0 = arith.constant 0 : i32
    %c0_i32_1 = arith.constant 0 : i32
    return %c0_i32, %c0_i32_0 : i32, i32
  }
  func.func @transform_6(%arg0: i32) -> (i32, i32) {
    %c0_i32 = arith.constant 0 : i32
    %c0_i32_0 = arith.constant 0 : i32
    %c0_i32_1 = arith.constant 0 : i32
    return %c0_i32, %c0_i32_0 : i32, i32
  }
  func.func @transform_7(%arg0: i32) -> (i32, i32) {
    %c0_i32 = arith.constant 0 : i32
    %c0_i32_0 = arith.constant 0 : i32
    return %arg0, %c0_i32 : i32, i32
  }
}

</mosaic_0001>

<llo_original>
// kernel: tpu_custom_call.1
$region0: #{tpu_custom_call.1}
  #allocation0 [shape = 'u32[]', space=smem, size = 0x4, offset = 0x4, fixed_abs, tag = 'smem constant byte address 0x4 - core index']
  #allocation1 [shape = 'u32[72,128]{1,0:T(1,128)}', space=vmem, size = 0x9000, scoped, tag = 'internal scratch']
  %s0 = inlined_call_operand.hbm [shape: bf16[8,32], index: 0, kind: input, shape index: {}]
  %s1 = inlined_call_operand.hbm [shape: bf16[32,256], index: 1, kind: input, shape index: {}]
  %s2 = inlined_call_operand.hbm [shape: f32[1,256], index: 2, kind: input, shape index: {}]
  %s3 = inlined_call_operand.hbm [shape: bf16[1,256,256], index: 3, kind: input, shape index: {}]
  %s4 = inlined_call_operand.vmem [shape: f32[1,256], index: 4, kind: input, shape index: {}]
  %s5 = inlined_call_operand.hbm [shape: bf16[256,128], index: 5, kind: input, shape index: {}]
  %s6 = inlined_call_operand.vmem [shape: f32[1,128], index: 6, kind: input, shape index: {}]
  %s7 = inlined_call_operand.hbm [shape: f32[8,128], index: 7, kind: output, shape index: {}]
  %s8 = sld [smem:[#allocation0]]
  $region58: #{tpu_custom_call.1} parent=0
    _
  %s10 = ssub.s32 1, %s8
  %s11 = scalar_select 0, %s10, %s8
  $region1: #{tpu_custom_call.1} parent=0
    #allocation2 [shape = 'u8[2048]{0}', space=vmem, size = 0x800, scoped, tag = 'input window, operand 0, single buffered']
    #allocation3 [shape = 's32[1]{0}', space=sflag, size = 0x4, scoped, tag = 'scoped memory for tpu_custom_call.1']
    #allocation4 [shape = 's32[1]{0}', space=sflag, size = 0x4, scoped, tag = 'scoped memory for tpu_custom_call.1']
    #allocation5 [shape = 'u8[16384]{0}', space=vmem, size = 0x4000, scoped, tag = 'input window, operand 1, single buffered']
    #allocation6 [shape = 's32[1]{0}', space=sflag, size = 0x4, scoped, tag = 'scoped memory for tpu_custom_call.1']
    #allocation7 [shape = 'u8[1024]{0}', space=vmem, size = 0x400, scoped, tag = 'input window, operand 2, single buffered']
    #allocation8 [shape = 'u8[131072]{0}', space=vmem, size = 0x20000, scoped, tag = 'input window, operand 3, single buffered']
    #allocation9 [shape = 's32[1]{0}', space=sflag, size = 0x4, scoped, tag = 'scoped memory for tpu_custom_call.1']
    #allocation10 [shape = 'u8[65536]{0}', space=vmem, size = 0x10000, scoped, tag = 'input window, operand 5, single buffered']
    #allocation11 [shape = 'u8[4096]{0}', space=vmem, size = 0x1000, scoped, tag = 'output window, operand 0, single buffered']
    %12 = vsyncpa [#allocation3], 0
    %13 = vsyncpa [#allocation6], 0
    %14 = vsyncpa [#allocation9], 0
    %15 = vsyncpa [#allocation4], 0
    // Predicated region
    $region2: #{tpu_custom_call.1} parent=1 // pred_check
      _
    $region3: #{tpu_custom_call.1} parent=1 // pred_check_branch
      %17 = sbr.rel (0) target = $region5
    $region4: #{tpu_custom_call.1} parent=1 // pred_region
      %19 = vsyncadd [#allocation3], 0
      %s21 = sshll.u32 %s0, 4
      %s22 = int_to_ptr.hbm [resolvable:$true] %s21
      %s23 = sshll.u32 [#allocation2], 4
      %s24 = int_to_ptr.vmem [resolvable:$true] %s23
      %26 = dma.hbm_to_vmem [thread:$0]  %s22, 64, %s24, [#allocation3]
    $region5: #{tpu_custom_call.1} parent=1 // pred_fallthru
      _
    // Predicated region
    $region6: #{tpu_custom_call.1} parent=1 // pred_check
      _
    $region7: #{tpu_custom_call.1} parent=1 // pred_check_branch
      %28 = sbr.rel (0) target = $region9
    $region8: #{tpu_custom_call.1} parent=1 // pred_region
      %30 = vsyncadd [#allocation6], 0
      %s31 = sshll.u32 %s1, 4
      %s32 = int_to_ptr.hbm [resolvable:$true] %s31
      %s33 = sshll.u32 [#allocation5], 4
      %s34 = int_to_ptr.vmem [resolvable:$true] %s33
      %39 = dma.hbm_to_vmem [thread:$0]  %s32, 512, %s34, [#allocation6], 128, 128, 8
    $region9: #{tpu_custom_call.1} parent=1 // pred_fallthru
      _
    // Predicated region
    $region10: #{tpu_custom_call.1} parent=1 // pred_check
      _
    $region11: #{tpu_custom_call.1} parent=1 // pred_check_branch
      %41 = sbr.rel (0) target = $region13
    $region12: #{tpu_custom_call.1} parent=1 // pred_region
      %43 = vsyncadd [#allocation6], 0
      %s45 = sshll.u32 %s2, 4
      %s46 = int_to_ptr.hbm [resolvable:$true] %s45
      %s47 = sshll.u32 [#allocation7], 4
      %s48 = int_to_ptr.vmem [resolvable:$true] %s47
      %50 = dma.hbm_to_vmem [thread:$0]  %s46, 32, %s48, [#allocation6]
    $region13: #{tpu_custom_call.1} parent=1 // pred_fallthru
      _
    // Predicated region
    $region14: #{tpu_custom_call.1} parent=1 // pred_check
      _
    $region15: #{tpu_custom_call.1} parent=1 // pred_check_branch
      %52 = sbr.rel (0) target = $region17
    $region16: #{tpu_custom_call.1} parent=1 // pred_region
      %54 = vsyncadd [#allocation9], 0
      %s55 = sshll.u32 %s3, 4
      %s56 = int_to_ptr.hbm [resolvable:$true] %s55
      %s57 = sshll.u32 [#allocation8], 4
      %s58 = int_to_ptr.vmem [resolvable:$true] %s57
      %63 = dma.hbm_to_vmem [thread:$0]  %s56, 4096, %s58, [#allocation9], 128, 128, 8
    $region17: #{tpu_custom_call.1} parent=1 // pred_fallthru
      _
    // Predicated region
    $region18: #{tpu_custom_call.1} parent=1 // pred_check
      _
    $region19: #{tpu_custom_call.1} parent=1 // pred_check_branch
      %65 = sbr.rel (0) target = $region21
    $region20: #{tpu_custom_call.1} parent=1 // pred_region
      _
    $region21: #{tpu_custom_call.1} parent=1 // pred_fallthru
      _
    // Predicated region
    $region22: #{tpu_custom_call.1} parent=1 // pred_check
      _
    $region23: #{tpu_custom_call.1} parent=1 // pred_check_branch
      %67 = sbr.rel (0) target = $region25
    $region24: #{tpu_custom_call.1} parent=1 // pred_region
      %69 = vsyncadd [#allocation9], 0
      %s70 = sshll.u32 %s5, 4
      %s71 = int_to_ptr.hbm [resolvable:$true] %s70
      %s72 = sshll.u32 [#allocation10], 4
      %s73 = int_to_ptr.vmem [resolvable:$true] %s72
      %78 = dma.hbm_to_vmem [thread:$0]  %s71, 2048, %s73, [#allocation9], 64, 64, 4
    $region25: #{tpu_custom_call.1} parent=1 // pred_fallthru
      _
    // Predicated region
    $region26: #{tpu_custom_call.1} parent=1 // pred_check
      _
    $region27: #{tpu_custom_call.1} parent=1 // pred_check_branch
      %80 = sbr.rel (0) target = $region29
    $region28: #{tpu_custom_call.1} parent=1 // pred_region
      _
    $region29: #{tpu_custom_call.1} parent=1 // pred_fallthru
      _
    // Predicated region
    $region30: #{tpu_custom_call.1} parent=1 // pred_check
      _
    $region31: #{tpu_custom_call.1} parent=1 // pred_check_branch
      %82 = sbr.rel (0) target = $region33
    $region32: #{tpu_custom_call.1} parent=1 // pred_region
      %84 = dma.done [#allocation3], 64
    $region33: #{tpu_custom_call.1} parent=1 // pred_fallthru
      _
    // Predicated region
    $region34: #{tpu_custom_call.1} parent=1 // pred_check
      _
    $region35: #{tpu_custom_call.1} parent=1 // pred_check_branch
      %86 = sbr.rel (0) target = $region37
    $region36: #{tpu_custom_call.1} parent=1 // pred_region
      %88 = dma.done [#allocation6], 512
    $region37: #{tpu_custom_call.1} parent=1 // pred_fallthru
      _
    // Predicated region
    $region38: #{tpu_custom_call.1} parent=1 // pred_check
      _
    $region39: #{tpu_custom_call.1} parent=1 // pred_check_branch
      %90 = sbr.rel (0) target = $region41
    $region40: #{tpu_custom_call.1} parent=1 // pred_region
      %92 = dma.done [#allocation6], 32
    $region41: #{tpu_custom_call.1} parent=1 // pred_fallthru
      _
    // Predicated region
    $region42: #{tpu_custom_call.1} parent=1 // pred_check
      _
    $region43: #{tpu_custom_call.1} parent=1 // pred_check_branch
      %94 = sbr.rel (0) target = $region45
    $region44: #{tpu_custom_call.1} parent=1 // pred_region
      %96 = dma.done [#allocation9], 4096
    $region45: #{tpu_custom_call.1} parent=1 // pred_fallthru
      _
    // Predicated region
    $region46: #{tpu_custom_call.1} parent=1 // pred_check
      _
    $region47: #{tpu_custom_call.1} parent=1 // pred_check_branch
      %98 = sbr.rel (0) target = $region49
    $region48: #{tpu_custom_call.1} parent=1 // pred_region
      %100 = dma.done [#allocation9], 2048
    $region49: #{tpu_custom_call.1} parent=1 // pred_fallthru
      _
    %v102 = vld [vmem:[#allocation2] sm:$0xf]
    %v103 = vld [vmem:[#allocation5] sm:$0xff]
    %v104 = vld [vmem:[#allocation5 + $0x8] sm:$0xff]
    %v105 = vld [vmem:[#allocation5 + $0x10] sm:$0xff]
    %v106 = vld [vmem:[#allocation5 + $0x18] sm:$0xff]
    %v107 = vld [vmem:[#allocation7] sm:$0x3]
    %v109 = vperm.slane %v107, 0
    %v110 = vperm.slane %v107, 1
    %v117 = vunpack.c.l.b16 %v103
    %v118 = vunpack.c.h.b16 %v103
    %v119 = vunpack.c.l.b16 %v104
    %v120 = vunpack.c.h.b16 %v104
    %v121 = vunpack.c.l.b16 %v105
    %v122 = vunpack.c.h.b16 %v105
    %v123 = vunpack.c.l.b16 %v106
    %v124 = vunpack.c.h.b16 %v106
    %v125 = vpack.c.b16 %v119, %v117
    %v126 = vpack.c.b16 %v120, %v118
    %v127 = vpack.c.b16 %v123, %v121
    %v128 = vpack.c.b16 %v124, %v122
    %vm133 = vcmask 261120
    %v135 = vsel %vm133, %v102, 0
    %137 = vmatpush.bf16.msra.mxu0 0
    %138 = vmatpush.bf16.msra.mxu0 0
    %139 = vmatpush.bf16.msra.mxu0 0
    %140 = vmatpush.bf16.msra.mxu0 0
    %141 = vmatpush.bf16.msra.mxu0 0
    %142 = vmatpush.bf16.msra.mxu0 0
    %143 = vmatpush.bf16.msra.mxu0 %v127
    %144 = vmatpush.bf16.msra.mxu0 %v125
    %145 = vmatmul.bf16.gmra.mxu0 %v135
    %v146 = vpop.f32.mrf.mxu0
    %v147 = vadd.f32 %v109, %v146
    %v148 = vpop.f32.mrf.mxu0
    %149 = vdwg.mxu0
    %150 = vmatpush.bf16.msra.mxu0 0
    %151 = vmatpush.bf16.msra.mxu0 0
    %152 = vmatpush.bf16.msra.mxu0 0
    %153 = vmatpush.bf16.msra.mxu0 0
    %154 = vmatpush.bf16.msra.mxu0 0
    %155 = vmatpush.bf16.msra.mxu0 0
    %156 = vmatpush.bf16.msra.mxu0 %v128
    %157 = vmatpush.bf16.msra.mxu0 %v126
    %158 = vmatmul.bf16.gmra.mxu0 %v135
    %v159 = vpop.f32.mrf.mxu0
    %v160 = vadd.f32 %v110, %v159
    %v161 = vpop.f32.mrf.mxu0
    %162 = vdwg.mxu0
    %v163 = vpack.c.bf16 %v147, %v147
    %v164 = vpack.c.bf16 %v160, %v160
    %v165 = vunpack.c.l.bf16 %v163
    %v166 = vunpack.c.l.bf16 %v164
    %v167 = vtanh.pop %v165
    %v168 = vtanh.pop %v166
    %v169 = vpack.c.bf16 %v167, %v167
    %v170 = vpack.c.bf16 %v168, %v168
    %v171 = vld [vmem:[#allocation8] sm:$0xff]
    %v172 = vld [vmem:[#allocation8 + $0x8] sm:$0xff]
    %v173 = vld [vmem:[#allocation8 + $0x10] sm:$0xff]
    %v174 = vld [vmem:[#allocation8 + $0x18] sm:$0xff]
    %v175 = vld [vmem:[#allocation8 + $0x20] sm:$0xff]
    %v176 = vld [vmem:[#allocation8 + $0x28] sm:$0xff]
    %v177 = vld [vmem:[#allocation8 + $0x30] sm:$0xff]
    %v178 = vld [vmem:[#allocation8 + $0x38] sm:$0xff]
    %v179 = vld [vmem:[#allocation8 + $0x40] sm:$0xff]
    %v180 = vld [vmem:[#allocation8 + $0x48] sm:$0xff]
    %v181 = vld [vmem:[#allocation8 + $0x50] sm:$0xff]
    %v182 = vld [vmem:[#allocation8 + $0x58] sm:$0xff]
    %v183 = vld [vmem:[#allocation8 + $0x60] sm:$0xff]
    %v184 = vld [vmem:[#allocation8 + $0x68] sm:$0xff]
    %v185 = vld [vmem:[#allocation8 + $0x70] sm:$0xff]
    %v186 = vld [vmem:[#allocation8 + $0x78] sm:$0xff]
    %v187 = vld [vmem:[#allocation8 + $0x80] sm:$0xff]
    %v188 = vld [vmem:[#allocation8 + $0x88] sm:$0xff]
    %v189 = vld [vmem:[#allocation8 + $0x90] sm:$0xff]
    %v190 = vld [vmem:[#allocation8 + $0x98] sm:$0xff]
    %v191 = vld [vmem:[#allocation8 + $0xa0] sm:$0xff]
    %v192 = vld [vmem:[#allocation8 + $0xa8] sm:$0xff]
    %v193 = vld [vmem:[#allocation8 + $0xb0] sm:$0xff]
    %v194 = vld [vmem:[#allocation8 + $0xb8] sm:$0xff]
    %v195 = vld [vmem:[#allocation8 + $0xc0] sm:$0xff]
    %v196 = vld [vmem:[#allocation8 + $0xc8] sm:$0xff]
    %v197 = vld [vmem:[#allocation8 + $0xd0] sm:$0xff]
    %v198 = vld [vmem:[#allocation8 + $0xd8] sm:$0xff]
    %v199 = vld [vmem:[#allocation8 + $0xe0] sm:$0xff]
    %v200 = vld [vmem:[#allocation8 + $0xe8] sm:$0xff]
    %v201 = vld [vmem:[#allocation8 + $0xf0] sm:$0xff]
    %v202 = vld [vmem:[#allocation8 + $0xf8] sm:$0xff]
    %v203 = vld [vmem:[%s4] sm:$0x3]
    %v205 = vperm.slane %v203, 0
    %v206 = vperm.slane %v203, 1
    %v241 = vunpack.c.l.b16 %v171
    %v242 = vunpack.c.h.b16 %v171
    %v243 = vunpack.c.l.b16 %v172
    %v244 = vunpack.c.h.b16 %v172
    %v245 = vunpack.c.l.b16 %v173
    %v246 = vunpack.c.h.b16 %v173
    %v247 = vunpack.c.l.b16 %v174
    %v248 = vunpack.c.h.b16 %v174
    %v249 = vunpack.c.l.b16 %v175
    %v250 = vunpack.c.h.b16 %v175
    %v251 = vunpack.c.l.b16 %v176
    %v252 = vunpack.c.h.b16 %v176
    %v253 = vunpack.c.l.b16 %v177
    %v254 = vunpack.c.h.b16 %v177
    %v255 = vunpack.c.l.b16 %v178
    %v256 = vunpack.c.h.b16 %v178
    %v257 = vunpack.c.l.b16 %v179
    %v258 = vunpack.c.h.b16 %v179
    %v259 = vunpack.c.l.b16 %v180
    %v260 = vunpack.c.h.b16 %v180
    %v261 = vunpack.c.l.b16 %v181
    %v262 = vunpack.c.h.b16 %v181
    %v263 = vunpack.c.l.b16 %v182
    %v264 = vunpack.c.h.b16 %v182
    %v265 = vunpack.c.l.b16 %v183
    %v266 = vunpack.c.h.b16 %v183
    %v267 = vunpack.c.l.b16 %v184
    %v268 = vunpack.c.h.b16 %v184
    %v269 = vunpack.c.l.b16 %v185
    %v270 = vunpack.c.h.b16 %v185
    %v271 = vunpack.c.l.b16 %v186
    %v272 = vunpack.c.h.b16 %v186
    %v273 = vunpack.c.l.b16 %v187
    %v274 = vunpack.c.h.b16 %v187
    %v275 = vunpack.c.l.b16 %v188
    %v276 = vunpack.c.h.b16 %v188
    %v277 = vunpack.c.l.b16 %v189
    %v278 = vunpack.c.h.b16 %v189
    %v279 = vunpack.c.l.b16 %v190
    %v280 = vunpack.c.h.b16 %v190
    %v281 = vunpack.c.l.b16 %v191
    %v282 = vunpack.c.h.b16 %v191
    %v283 = vunpack.c.l.b16 %v192
    %v284 = vunpack.c.h.b16 %v192
    %v285 = vunpack.c.l.b16 %v193
    %v286 = vunpack.c.h.b16 %v193
    %v287 = vunpack.c.l.b16 %v194
    %v288 = vunpack.c.h.b16 %v194
    %v289 = vunpack.c.l.b16 %v195
    %v290 = vunpack.c.h.b16 %v195
    %v291 = vunpack.c.l.b16 %v196
    %v292 = vunpack.c.h.b16 %v196
    %v293 = vunpack.c.l.b16 %v197
    %v294 = vunpack.c.h.b16 %v197
    %v295 = vunpack.c.l.b16 %v198
    %v296 = vunpack.c.h.b16 %v198
    %v297 = vunpack.c.l.b16 %v199
    %v298 = vunpack.c.h.b16 %v199
    %v299 = vunpack.c.l.b16 %v200
    %v300 = vunpack.c.h.b16 %v200
    %v301 = vunpack.c.l.b16 %v201
    %v302 = vunpack.c.h.b16 %v201
    %v303 = vunpack.c.l.b16 %v202
    %v304 = vunpack.c.h.b16 %v202
    %v305 = vpack.c.b16 %v243, %v241
    %v306 = vpack.c.b16 %v244, %v242
    %v307 = vpack.c.b16 %v247, %v245
    %v308 = vpack.c.b16 %v248, %v246
    %v309 = vpack.c.b16 %v251, %v249
    %v310 = vpack.c.b16 %v252, %v250
    %v311 = vpack.c.b16 %v255, %v253
    %v312 = vpack.c.b16 %v256, %v254
    %v313 = vpack.c.b16 %v259, %v257
    %v314 = vpack.c.b16 %v260, %v258
    %v315 = vpack.c.b16 %v263, %v261
    %v316 = vpack.c.b16 %v264, %v262
    %v317 = vpack.c.b16 %v267, %v265
    %v318 = vpack.c.b16 %v268, %v266
    %v319 = vpack.c.b16 %v271, %v269
    %v320 = vpack.c.b16 %v272, %v270
    %v321 = vpack.c.b16 %v275, %v273
    %v322 = vpack.c.b16 %v276, %v274
    %v323 = vpack.c.b16 %v279, %v277
    %v324 = vpack.c.b16 %v280, %v278
    %v325 = vpack.c.b16 %v283, %v281
    %v326 = vpack.c.b16 %v284, %v282
    %v327 = vpack.c.b16 %v287, %v285
    %v328 = vpack.c.b16 %v288, %v286
    %v329 = vpack.c.b16 %v291, %v289
    %v330 = vpack.c.b16 %v292, %v290
    %v331 = vpack.c.b16 %v295, %v293
    %v332 = vpack.c.b16 %v296, %v294
    %v333 = vpack.c.b16 %v299, %v297
    %v334 = vpack.c.b16 %v300, %v298
    %v335 = vpack.c.b16 %v303, %v301
    %v336 = vpack.c.b16 %v304, %v302
    %369 = vmatpush.bf16.msra.mxu0 %v319
    %370 = vmatpush.bf16.msra.mxu0 %v317
    %371 = vmatpush.bf16.msra.mxu0 %v315
    %372 = vmatpush.bf16.msra.mxu0 %v313
    %373 = vmatpush.bf16.msra.mxu0 %v311
    %374 = vmatpush.bf16.msra.mxu0 %v309
    %375 = vmatpush.bf16.msra.mxu0 %v307
    %376 = vmatpush.bf16.msra.mxu0 %v305
    %377 = vmatmul.bf16.gmra.mxu0 %v169
    %v378 = vpop.f32.mrf.mxu0
    %v379 = vadd.f32 %v205, %v378
    %v380 = vpop.f32.mrf.mxu0
    %381 = vdwg.mxu0
    %382 = vmatpush.bf16.msra.mxu0 %v335
    %383 = vmatpush.bf16.msra.mxu0 %v333
    %384 = vmatpush.bf16.msra.mxu0 %v331
    %385 = vmatpush.bf16.msra.mxu0 %v329
    %386 = vmatpush.bf16.msra.mxu0 %v327
    %387 = vmatpush.bf16.msra.mxu0 %v325
    %388 = vmatpush.bf16.msra.mxu0 %v323
    %389 = vmatpush.bf16.msra.mxu0 %v321
    %390 = vmatmul.bf16.gmra.mxu0 %v170
    %v391 = vpop.f32.mrf.mxu0
    %v392 = vadd.f32 %v379, %v391
    %v393 = vpop.f32.mrf.mxu0
    %394 = vdwg.mxu0
    %395 = vmatpush.bf16.msra.mxu0 %v320
    %396 = vmatpush.bf16.msra.mxu0 %v318
    %397 = vmatpush.bf16.msra.mxu0 %v316
    %398 = vmatpush.bf16.msra.mxu0 %v314
    %399 = vmatpush.bf16.msra.mxu0 %v312
    %400 = vmatpush.bf16.msra.mxu0 %v310
    %401 = vmatpush.bf16.msra.mxu0 %v308
    %402 = vmatpush.bf16.msra.mxu0 %v306
    %403 = vmatmul.bf16.gmra.mxu0 %v169
    %v404 = vpop.f32.mrf.mxu0
    %v405 = vadd.f32 %v206, %v404
    %v406 = vpop.f32.mrf.mxu0
    %407 = vdwg.mxu0
    %408 = vmatpush.bf16.msra.mxu0 %v336
    %409 = vmatpush.bf16.msra.mxu0 %v334
    %410 = vmatpush.bf16.msra.mxu0 %v332
    %411 = vmatpush.bf16.msra.mxu0 %v330
    %412 = vmatpush.bf16.msra.mxu0 %v328
    %413 = vmatpush.bf16.msra.mxu0 %v326
    %414 = vmatpush.bf16.msra.mxu0 %v324
    %415 = vmatpush.bf16.msra.mxu0 %v322
    %416 = vmatmul.bf16.gmra.mxu0 %v170
    %v417 = vpop.f32.mrf.mxu0
    %v418 = vadd.f32 %v405, %v417
    %v419 = vpop.f32.mrf.mxu0
    %420 = vdwg.mxu0
    %v421 = vpack.c.bf16 %v392, %v392
    %v422 = vpack.c.bf16 %v418, %v418
    %v423 = vunpack.c.l.bf16 %v421
    %v424 = vunpack.c.l.bf16 %v422
    %v425 = vtanh.pop %v423
    %v426 = vtanh.pop %v424
    %v427 = vpack.c.bf16 %v425, %v425
    %v428 = vpack.c.bf16 %v426, %v426
    %v429 = vld [vmem:[#allocation10] sm:$0xf]
    %v430 = vld [vmem:[#allocation10 + $0x4] sm:$0xf]
    %v431 = vld [vmem:[#allocation10 + $0x8] sm:$0xf]
    %v432 = vld [vmem:[#allocation10 + $0xc] sm:$0xf]
    %v433 = vld [vmem:[#allocation10 + $0x10] sm:$0xf]
    %v434 = vld [vmem:[#allocation10 + $0x14] sm:$0xf]
    %v435 = vld [vmem:[#allocation10 + $0x18] sm:$0xf]
    %v436 = vld [vmem:[#allocation10 + $0x1c] sm:$0xf]
    %v437 = vld [vmem:[#allocation10 + $0x20] sm:$0xf]
    %v438 = vld [vmem:[#allocation10 + $0x24] sm:$0xf]
    %v439 = vld [vmem:[#allocation10 + $0x28] sm:$0xf]
    %v440 = vld [vmem:[#allocation10 + $0x2c] sm:$0xf]
    %v441 = vld [vmem:[#allocation10 + $0x30] sm:$0xf]
    %v442 = vld [vmem:[#allocation10 + $0x34] sm:$0xf]
    %v443 = vld [vmem:[#allocation10 + $0x38] sm:$0xf]
    %v444 = vld [vmem:[#allocation10 + $0x3c] sm:$0xf]
    %v445 = vld [vmem:[#allocation10 + $0x40] sm:$0xf]
    %v446 = vld [vmem:[#allocation10 + $0x44] sm:$0xf]
    %v447 = vld [vmem:[#allocation10 + $0x48] sm:$0xf]
    %v448 = vld [vmem:[#allocation10 + $0x4c] sm:$0xf]
    %v449 = vld [vmem:[#allocation10 + $0x50] sm:$0xf]
    %v450 = vld [vmem:[#allocation10 + $0x54] sm:$0xf]
    %v451 = vld [vmem:[#allocation10 + $0x58] sm:$0xf]
    %v452 = vld [vmem:[#allocation10 + $0x5c] sm:$0xf]
    %v453 = vld [vmem:[#allocation10 + $0x60] sm:$0xf]
    %v454 = vld [vmem:[#allocation10 + $0x64] sm:$0xf]
    %v455 = vld [vmem:[#allocation10 + $0x68] sm:$0xf]
    %v456 = vld [vmem:[#allocation10 + $0x6c] sm:$0xf]
    %v457 = vld [vmem:[#allocation10 + $0x70] sm:$0xf]
    %v458 = vld [vmem:[#allocation10 + $0x74] sm:$0xf]
    %v459 = vld [vmem:[#allocation10 + $0x78] sm:$0xf]
    %v460 = vld [vmem:[#allocation10 + $0x7c] sm:$0xf]
    %v461 = vld [vmem:[%s6] sm:$0x1]
    %v463 = vperm.slane %v461, 0
    %v497 = vunpack.c.l.b16 %v429
    %v498 = vunpack.c.l.b16 %v430
    %v499 = vunpack.c.l.b16 %v431
    %v500 = vunpack.c.l.b16 %v432
    %v501 = vunpack.c.l.b16 %v433
    %v502 = vunpack.c.l.b16 %v434
    %v503 = vunpack.c.l.b16 %v435
    %v504 = vunpack.c.l.b16 %v436
    %v505 = vunpack.c.l.b16 %v437
    %v506 = vunpack.c.l.b16 %v438
    %v507 = vunpack.c.l.b16 %v439
    %v508 = vunpack.c.l.b16 %v440
    %v509 = vunpack.c.l.b16 %v441
    %v510 = vunpack.c.l.b16 %v442
    %v511 = vunpack.c.l.b16 %v443
    %v512 = vunpack.c.l.b16 %v444
    %v513 = vunpack.c.l.b16 %v445
    %v514 = vunpack.c.l.b16 %v446
    %v515 = vunpack.c.l.b16 %v447
    %v516 = vunpack.c.l.b16 %v448
    %v517 = vunpack.c.l.b16 %v449
    %v518 = vunpack.c.l.b16 %v450
    %v519 = vunpack.c.l.b16 %v451
    %v520 = vunpack.c.l.b16 %v452
    %v521 = vunpack.c.l.b16 %v453
    %v522 = vunpack.c.l.b16 %v454
    %v523 = vunpack.c.l.b16 %v455
    %v524 = vunpack.c.l.b16 %v456
    %v525 = vunpack.c.l.b16 %v457
    %v526 = vunpack.c.l.b16 %v458
    %v527 = vunpack.c.l.b16 %v459
    %v528 = vunpack.c.l.b16 %v460
    %v529 = vpack.c.b16 %v498, %v497
    %v530 = vpack.c.b16 %v500, %v499
    %v531 = vpack.c.b16 %v502, %v501
    %v532 = vpack.c.b16 %v504, %v503
    %v533 = vpack.c.b16 %v506, %v505
    %v534 = vpack.c.b16 %v508, %v507
    %v535 = vpack.c.b16 %v510, %v509
    %v536 = vpack.c.b16 %v512, %v511
    %v537 = vpack.c.b16 %v514, %v513
    %v538 = vpack.c.b16 %v516, %v515
    %v539 = vpack.c.b16 %v518, %v517
    %v540 = vpack.c.b16 %v520, %v519
    %v541 = vpack.c.b16 %v522, %v521
    %v542 = vpack.c.b16 %v524, %v523
    %v543 = vpack.c.b16 %v526, %v525
    %v544 = vpack.c.b16 %v528, %v527
    %561 = vmatpush.bf16.msra.mxu0 %v536
    %562 = vmatpush.bf16.msra.mxu0 %v535
    %563 = vmatpush.bf16.msra.mxu0 %v534
    %564 = vmatpush.bf16.msra.mxu0 %v533
    %565 = vmatpush.bf16.msra.mxu0 %v532
    %566 = vmatpush.bf16.msra.mxu0 %v531
    %567 = vmatpush.bf16.msra.mxu0 %v530
    %568 = vmatpush.bf16.msra.mxu0 %v529
    %569 = vmatmul.bf16.gmra.mxu0 %v427
    %v570 = vpop.f32.mrf.mxu0
    %v571 = vadd.f32 %v463, %v570
    %v572 = vpop.f32.mrf.mxu0
    %573 = vdwg.mxu0
    %574 = vmatpush.bf16.msra.mxu0 %v544
    %575 = vmatpush.bf16.msra.mxu0 %v543
    %576 = vmatpush.bf16.msra.mxu0 %v542
    %577 = vmatpush.bf16.msra.mxu0 %v541
    %578 = vmatpush.bf16.msra.mxu0 %v540
    %579 = vmatpush.bf16.msra.mxu0 %v539
    %580 = vmatpush.bf16.msra.mxu0 %v538
    %581 = vmatpush.bf16.msra.mxu0 %v537
    %582 = vmatmul.bf16.gmra.mxu0 %v428
    %v583 = vpop.f32.mrf.mxu0
    %v584 = vadd.f32 %v571, %v583
    %v585 = vpop.f32.mrf.mxu0
    %586 = vdwg.mxu0
    %587 = vst [vmem:[#allocation11] sm:$0xff] %v584
    // Predicated region
    $region50: #{tpu_custom_call.1} parent=1 // pred_check
      _
    $region51: #{tpu_custom_call.1} parent=1 // pred_check_branch
      %589 = sbr.rel (0) target = $region53
    $region52: #{tpu_custom_call.1} parent=1 // pred_region
      %591 = vsyncadd [#allocation4], 0
      %s593 = sshll.u32 [#allocation11], 4
      %s594 = int_to_ptr.vmem [resolvable:$true] %s593
      %s595 = sshll.u32 %s7, 4
      %s596 = int_to_ptr.hbm [resolvable:$true] %s595
      %598 = dma.vmem_to_hbm [thread:$0]  %s594, 128, %s596, [#allocation4]
    $region53: #{tpu_custom_call.1} parent=1 // pred_fallthru
      _
    // Predicated region
    $region54: #{tpu_custom_call.1} parent=1 // pred_check
      _
    $region55: #{tpu_custom_call.1} parent=1 // pred_check_branch
      %600 = sbr.rel (0) target = $region57
    $region56: #{tpu_custom_call.1} parent=1 // pred_region
      %602 = dma.done [#allocation4], 128
    $region57: #{tpu_custom_call.1} parent=1 // pred_fallthru
      _
    %603 = vsyncpa [#allocation3], 1
    %604 = vsyncpa [#allocation6], 1
    %605 = vsyncpa [#allocation9], 1
    %606 = vsyncpa [#allocation4], 1

</llo_original>
